<compile_context>
chip_gen: v6e
topology: v6e:2x2x1
jax: 0.10.0
libtpu: 0.0.40
codegen_flags: <defaults>
</compile_context>

<pallas_src>
import functools
import math

import jax
import jax.numpy as jnp
from jax.experimental import pallas as pl
from jax.experimental.pallas import tpu as pltpu

# Module constants (from Swingloss.__init__)
W1 = 1.5
W2 = 10.0
EPSILON = 2.0
CONSTANT = W1 - W2 * math.log(1.0 + W1 / EPSILON)
WEIGHT = 8.0

LANES = 128
SUBLANES = 8
TILE_ROWS = 2048  # (2048, 128) f32 block = 1 MiB/input/buffer; fits v5e/v6e/v7x defaults


def _swing_loss_kernel(pred_ref, gt_ref, out_ref, *, tile_rows, valid_rows, needs_mask):
    pred = pred_ref[...].astype(jnp.float32)
    gt = gt_ref[...].astype(jnp.float32)

    weight_mask = gt * WEIGHT + 1.0
    d = pred - gt
    diff = d * d
    loss = jnp.where(diff < W1, diff, W2 * jnp.log(1.0 + diff / EPSILON) + CONSTANT)
    loss = loss * weight_mask

    if needs_mask:
        # Last grid step may read past the end of the array (boundary block);
        # zero out rows beyond the real data (robust even to garbage/NaN fill).
        row_ids = jax.lax.broadcasted_iota(jnp.int32, loss.shape, 0)
        global_rows = row_ids + pl.program_id(0) * tile_rows
        loss = jnp.where(global_rows < valid_rows, loss, 0.0)

    # Per-lane partial sums: pure VPU adds across vregs (no XLU reduce, no
    # narrow masked store in the hot loop). Final reduce happens in the wrapper.
    out_ref[...] = loss.reshape(tile_rows // SUBLANES, SUBLANES, LANES).sum(axis=0)


def swing_loss(prediction, gt, *, tile_rows=TILE_ROWS):
    """Pallas TPU implementation of Swingloss.forward. Returns a scalar float32."""
    assert prediction.shape == gt.shape
    p = prediction.reshape(-1)  # keep native dtype; cast happens in-kernel
    g = gt.reshape(-1)
    n = p.shape[0]
    assert n > 0

    # Only pad when numel is not a multiple of one (8, 128) vreg; zero padding
    # contributes exactly 0 to this loss (pred=gt=0 -> diff=0<w1 -> 0*1).
    chunk = SUBLANES * LANES
    pad = (-n) % chunk
    if pad:
        p = jnp.pad(p, (0, pad))
        g = jnp.pad(g, (0, pad))

    rows = (n + pad) // LANES  # always a multiple of SUBLANES
    p2 = p.reshape(rows, LANES)
    g2 = g.reshape(rows, LANES)

    tr = min(tile_rows, rows)
    tr = max(SUBLANES, tr - (tr % SUBLANES))  # keep sublane-aligned tile
    num_tiles = pl.cdiv(rows, tr)
    needs_mask = (rows % tr) != 0

    kernel = functools.partial(
        _swing_loss_kernel, tile_rows=tr, valid_rows=rows, needs_mask=needs_mask
    )

    partials = pl.pallas_call(
        kernel,
        out_shape=jax.ShapeDtypeStruct((num_tiles * SUBLANES, LANES), jnp.float32),
        grid_spec=pltpu.PrefetchScalarGridSpec(
            num_scalar_prefetch=0,
            grid=(num_tiles,),
            in_specs=[
                pl.BlockSpec((tr, LANES), lambda i: (i, 0)),
                pl.BlockSpec((tr, LANES), lambda i: (i, 0)),
            ],
            out_specs=pl.BlockSpec((SUBLANES, LANES), lambda i: (i, 0)),
        ),
        compiler_params=pltpu.CompilerParams(
            # Fully data-parallel: each tile writes its own partial block, so the
            # axis can shard across both TensorCores on v7x (no-op on v5e/v6e).
            dimension_semantics=("parallel",),
        ),
    )(p2, g2)

    # Tiny final reduction (num_tiles * 1024 f32 elements) done by XLA.
    return jnp.sum(partials)


def swing_loss_ref(prediction, gt):
    """Pure-JAX reference mirroring the PyTorch module."""
    pred = prediction.astype(jnp.float32)
    g = gt.astype(jnp.float32)
    weight_mask = g * WEIGHT + 1.0
    diff = (pred - g) ** 2
    loss = jnp.where(diff < W1, diff, W2 * jnp.log(1.0 + diff / EPSILON) + CONSTANT)
    loss = loss * weight_mask
    return jnp.sum(loss)


if __name__ == "__main__":
    key = jax.random.PRNGKey(0)
    k1, k2, k3, k4 = jax.random.split(key, 4)

    # Small NCHW heatmaps (lane-aligned case, single tile).
    shape = (2, 4, 16, 16)
    prediction = jax.random.normal(k1, shape, dtype=jnp.float32)
    gt = jax.random.uniform(k2, shape, dtype=jnp.float32)  # heatmap-like in [0, 1)

    out = swing_loss(prediction, gt)
    jax.block_until_ready(out)
    ref = swing_loss_ref(prediction, gt)
    assert jnp.allclose(out, ref, rtol=1e-5, atol=1e-3), (out, ref)

    # Second shape exercising multi-tile grid + boundary-block masking path.
    shape2 = (2, 4, 200, 200)
    p_big = jax.random.normal(k3, shape2, dtype=jnp.float32)
    g_big = jax.random.uniform(k4, shape2, dtype=jnp.float32)
    out2 = swing_loss(p_big, g_big)
    jax.block_until_ready(out2)
    ref2 = swing_loss_ref(p_big, g_big)
    assert jnp.allclose(out2, ref2, rtol=1e-4, atol=1e-1), (out2, ref2)

    print("KERNEL_OK")
</pallas_src>

<mosaic_0001>
module attributes {stable_mosaic.version = 11 : i64} {
  func.func @_swing_loss_kernel(%arg0: i32, %arg1: memref<16x128xf32, #tpu.memory_space<vmem>>, %arg2: memref<16x128xf32, #tpu.memory_space<vmem>>, %arg3: memref<8x128xf32, #tpu.memory_space<vmem>>) attributes {dimension_semantics = [#tpu.dimension_semantics<parallel>], iteration_bounds = array<i64: 1>, scalar_prefetch = 0 : i64, scratch_operands = 0 : i64, tpu.core_type = #tpu.core_type<tc>, window_params = [{transform_indices = @transform_0, window_bounds = array<i64: 16, 128>}, {transform_indices = @transform_1, window_bounds = array<i64: 16, 128>}, {transform_indices = @transform_2, window_bounds = array<i64: 8, 128>}]} {
    %c0 = arith.constant 0 : index
    %c0_0 = arith.constant 0 : index
    %0 = vector.load %arg1[%c0, %c0_0] : memref<16x128xf32, #tpu.memory_space<vmem>>, vector<16x128xf32>
    %c0_1 = arith.constant 0 : index
    %c0_2 = arith.constant 0 : index
    %1 = vector.load %arg2[%c0_1, %c0_2] : memref<16x128xf32, #tpu.memory_space<vmem>>, vector<16x128xf32>
    %cst = arith.constant 8.000000e+00 : f32
    %2 = vector.broadcast %cst : f32 to vector<16x128xf32>
    %3 = arith.mulf %1, %2 : vector<16x128xf32>
    %cst_3 = arith.constant 1.000000e+00 : f32
    %4 = vector.broadcast %cst_3 : f32 to vector<16x128xf32>
    %5 = arith.addf %3, %4 : vector<16x128xf32>
    %6 = arith.subf %0, %1 : vector<16x128xf32>
    %7 = arith.mulf %6, %6 : vector<16x128xf32>
    %cst_4 = arith.constant 1.500000e+00 : f32
    %8 = vector.broadcast %cst_4 : f32 to vector<16x128xf32>
    %9 = arith.cmpf olt, %7, %8 : vector<16x128xf32>
    %cst_5 = arith.constant 2.000000e+00 : f32
    %10 = vector.broadcast %cst_5 : f32 to vector<16x128xf32>
    %11 = arith.divf %7, %10 : vector<16x128xf32>
    %cst_6 = arith.constant 1.000000e+00 : f32
    %12 = vector.broadcast %cst_6 : f32 to vector<16x128xf32>
    %13 = arith.addf %12, %11 : vector<16x128xf32>
    %14 = math.log %13 : vector<16x128xf32>
    %cst_7 = arith.constant 1.000000e+01 : f32
    %15 = vector.broadcast %cst_7 : f32 to vector<16x128xf32>
    %16 = arith.mulf %15, %14 : vector<16x128xf32>
    %cst_8 = arith.constant -4.09615803 : f32
    %17 = vector.broadcast %cst_8 : f32 to vector<16x128xf32>
    %18 = arith.addf %16, %17 : vector<16x128xf32>
    %19 = arith.select %9, %7, %18 : vector<16x128xi1>, vector<16x128xf32>
    %20 = arith.mulf %19, %5 : vector<16x128xf32>
    %21 = vector.shape_cast %20 : vector<16x128xf32> to vector<2x8x128xf32>
    %cst_9 = arith.constant dense<0.000000e+00> : vector<8x128xf32>
    %22 = vector.multi_reduction <add>, %21, %cst_9 [0] : vector<2x8x128xf32> to vector<8x128xf32>
    %c0_10 = arith.constant 0 : index
    %c0_11 = arith.constant 0 : index
    %23 = vector.load %arg3[%c0_10, %c0_11] : memref<8x128xf32, #tpu.memory_space<vmem>>, vector<8x128xf32>
    tpu.vector_store %arg3[%c0_10, %c0_11], %22 {strides = array<i32>} : memref<8x128xf32, #tpu.memory_space<vmem>>, vector<8x128xf32>,
    return
  }
  func.func @transform_0(%arg0: i32) -> (i32, i32) {
    %c0_i32 = arith.constant 0 : i32
    %c0_i32_0 = arith.constant 0 : i32
    return %arg0, %c0_i32 : i32, i32
  }
  func.func @transform_1(%arg0: i32) -> (i32, i32) {
    %c0_i32 = arith.constant 0 : i32
    %c0_i32_0 = arith.constant 0 : i32
    return %arg0, %c0_i32 : i32, i32
  }
  func.func @transform_2(%arg0: i32) -> (i32, i32) {
    %c0_i32 = arith.constant 0 : i32
    %c0_i32_0 = arith.constant 0 : i32
    return %arg0, %c0_i32 : i32, i32
  }
}

</mosaic_0001>

<llo_original>
// kernel: tpu_custom_call.1
$region0: #{tpu_custom_call.1}
  #allocation0 [shape = 'u32[]', space=smem, size = 0x4, offset = 0x4, fixed_abs, tag = 'smem constant byte address 0x4 - core index']
  #allocation1 [shape = 'u32[144,128]{1,0:T(1,128)}', space=vmem, size = 0x12000, scoped, tag = 'internal scratch']
  %s0 = inlined_call_operand.hbm [shape: f32[16,128], index: 0, kind: input, shape index: {}]
  %s1 = inlined_call_operand.hbm [shape: f32[16,128], index: 1, kind: input, shape index: {}]
  %s2 = inlined_call_operand.hbm [shape: f32[8,128], index: 2, kind: output, shape index: {}]
  %s3 = sld [smem:[#allocation0]]
  $region26: #{tpu_custom_call.1} parent=0
    _
  %s5 = ssub.s32 1, %s3
  %s6 = scalar_select 0, %s5, %s3
  $region1: #{tpu_custom_call.1} parent=0
    #allocation2 [shape = 'u8[8192]{0}', space=vmem, size = 0x2000, scoped, tag = 'input window, operand 0, single buffered']
    #allocation3 [shape = 's32[1]{0}', space=sflag, size = 0x4, scoped, tag = 'scoped memory for tpu_custom_call.1']
    #allocation4 [shape = 's32[1]{0}', space=sflag, size = 0x4, scoped, tag = 'scoped memory for tpu_custom_call.1']
    #allocation5 [shape = 'u8[8192]{0}', space=vmem, size = 0x2000, scoped, tag = 'input window, operand 1, single buffered']
    #allocation6 [shape = 's32[1]{0}', space=sflag, size = 0x4, scoped, tag = 'scoped memory for tpu_custom_call.1']
    #allocation7 [shape = 'u8[4096]{0}', space=vmem, size = 0x1000, scoped, tag = 'output window, operand 0, single buffered']
    %7 = vsyncpa [#allocation3], 0
    %8 = vsyncpa [#allocation6], 0
    %9 = vsyncpa [#allocation4], 0
    // Predicated region
    $region2: #{tpu_custom_call.1} parent=1 // pred_check
      _
    $region3: #{tpu_custom_call.1} parent=1 // pred_check_branch
      %11 = sbr.rel (0) target = $region5
    $region4: #{tpu_custom_call.1} parent=1 // pred_region
      %s13 = ssub.s32 256, 256
      %14 = vsyncadd [#allocation3], %s13
      %s15 = sshll.u32 [#allocation2], 4
      %s16 = int_to_ptr.vmem [resolvable:$true] %s15
      %21 = dma.hbm_to_vmem [thread:$0]  %s0, 256, %s16, [#allocation3], 128, 128, 8
    $region5: #{tpu_custom_call.1} parent=1 // pred_fallthru
      _
    // Predicated region
    $region6: #{tpu_custom_call.1} parent=1 // pred_check
      _
    $region7: #{tpu_custom_call.1} parent=1 // pred_check_branch
      %23 = sbr.rel (0) target = $region9
    $region8: #{tpu_custom_call.1} parent=1 // pred_region
      %s25 = ssub.s32 256, 256
      %26 = vsyncadd [#allocation6], %s25
      %s27 = sshll.u32 [#allocation5], 4
      %s28 = int_to_ptr.vmem [resolvable:$true] %s27
      %33 = dma.hbm_to_vmem [thread:$0]  %s1, 256, %s28, [#allocation6], 128, 128, 8
    $region9: #{tpu_custom_call.1} parent=1 // pred_fallthru
      _
    // Predicated region
    $region10: #{tpu_custom_call.1} parent=1 // pred_check
      _
    $region11: #{tpu_custom_call.1} parent=1 // pred_check_branch
      %35 = sbr.rel (0) target = $region13
    $region12: #{tpu_custom_call.1} parent=1 // pred_region
      %36 = dma.done [#allocation3], 256
    $region13: #{tpu_custom_call.1} parent=1 // pred_fallthru
      _
    // Predicated region
    $region14: #{tpu_custom_call.1} parent=1 // pred_check
      _
    $region15: #{tpu_custom_call.1} parent=1 // pred_check_branch
      %38 = sbr.rel (0) target = $region17
    $region16: #{tpu_custom_call.1} parent=1 // pred_region
      %39 = dma.done [#allocation6], 256
    $region17: #{tpu_custom_call.1} parent=1 // pred_fallthru
      _
    %v40 = vld [vmem:[#allocation2] sm:$0xff]
    %v41 = vld [vmem:[#allocation2 + $0x8] sm:$0xff]
    %v42 = vld [vmem:[#allocation5] sm:$0xff]
    %v43 = vld [vmem:[#allocation5 + $0x8] sm:$0xff]
    %v44 = vmul.f32 %v42, 8.0
    %v45 = vmul.f32 %v43, 8.0
    %v46 = vadd.f32 %v44, 1.0
    %v47 = vadd.f32 %v45, 1.0
    %v48 = vsub.f32 %v40, %v42
    %v49 = vsub.f32 %v41, %v43
    %v50 = vmul.f32 %v48, %v48
    %v51 = vmul.f32 %v49, %v49
    %vm52 = vcmp.lt.f32.partialorder %v50, 1.5
    %vm53 = vcmp.lt.f32.partialorder %v51, 1.5
    %v54 = vrcp.pop 2.0
    %v55 = vmul.f32 %v50, %v54
    %v56 = vmul.f32 %v51, %v54
    %v57 = vadd.f32 %v55, 1.0
    %v58 = vadd.f32 %v56, 1.0
    %v59 = vlog2.pop %v57
    %v60 = vmul.f32 %v59, 0.6931472
    %v61 = vlog2.pop %v58
    %v62 = vmul.f32 %v61, 0.6931472
    %v63 = vmul.f32 %v60, 10.0
    %v64 = vmul.f32 %v62, 10.0
    %v65 = vadd.f32 %v63, -4.096158
    %v66 = vadd.f32 %v64, -4.096158
    %v67 = vsel %vm52, %v50, %v65
    %v68 = vsel %vm53, %v51, %v66
    %v69 = vmul.f32 %v67, %v46
    %v70 = vmul.f32 %v68, %v47
    %v71 = vadd.f32 %v69, %v70
    %72 = vst [vmem:[#allocation7] sm:$0xff] %v71
    // Predicated region
    $region18: #{tpu_custom_call.1} parent=1 // pred_check
      _
    $region19: #{tpu_custom_call.1} parent=1 // pred_check_branch
      %74 = sbr.rel (0) target = $region21
    $region20: #{tpu_custom_call.1} parent=1 // pred_region
      %s76 = ssub.s32 128, 128
      %77 = vsyncadd [#allocation4], %s76
      %s79 = sshll.u32 [#allocation7], 4
      %s80 = int_to_ptr.vmem [resolvable:$true] %s79
      %82 = dma.vmem_to_hbm [thread:$0]  %s80, 128, %s2, [#allocation4]
    $region21: #{tpu_custom_call.1} parent=1 // pred_fallthru
      _
    // Predicated region
    $region22: #{tpu_custom_call.1} parent=1 // pred_check
      _
    $region23: #{tpu_custom_call.1} parent=1 // pred_check_branch
      %84 = sbr.rel (0) target = $region25
    $region24: #{tpu_custom_call.1} parent=1 // pred_region
      %85 = dma.done [#allocation4], 128
    $region25: #{tpu_custom_call.1} parent=1 // pred_fallthru
      _
    %86 = vsyncpa [#allocation3], 1
    %87 = vsyncpa [#allocation6], 1
    %88 = vsyncpa [#allocation4], 1

</llo_original>
